<compile_context>
chip_gen: v7x
topology: tpu7x:2x2x1
jax: 0.10.0
libtpu: 0.0.40
codegen_flags: <defaults>
</compile_context>

<pallas_src>
import jax
import jax.numpy as jnp
from jax.experimental import pallas as pl
from jax.experimental.pallas import tpu as pltpu


def _mlp_kernel(x_ref, w1_ref, b1_ref, w2_ref, b2_ref, o_ref):
    # y = relu(x @ W1 + b1) @ W2 + b2 — two MXU matmuls with f32 accumulation,
    # bias add + ReLU on the VPU.
    x = x_ref[...]
    h = jnp.dot(x, w1_ref[...], preferred_element_type=jnp.float32)
    h = jnp.maximum(h + b1_ref[...], 0.0)            # (TB, Hp) + (1, Hp) broadcast
    y = jnp.dot(h, w2_ref[...], preferred_element_type=jnp.float32)
    o_ref[...] = (y + b2_ref[...]).astype(o_ref.dtype)


def _round_up(n, m):
    return ((n + m - 1) // m) * m


def _pick_batch_tile(B, Dp, Hp, Op, tile_b, vmem_budget_bytes=24 << 20):
    """Largest batch tile (<= tile_b, multiple of 8) that fits the VMEM budget.

    Resident: W1 (Dp,Hp) + W2 (Hp,Op) + biases.
    Per grid step (double-buffered): x (tb,Dp), out (tb,Op); plus one
    intermediate h (tb,Hp) in compiler scratch.
    """
    tb = min(tile_b, _round_up(B, 8))
    fixed = 4 * (Dp * Hp + Hp * Op + Hp + Op)
    per_row = 4 * (2 * Dp + 2 * Op + Hp)
    max_rows = max((vmem_budget_bytes - fixed) // max(per_row, 1), 8)
    tb = min(tb, int(max_rows))
    tb = max((tb // 8) * 8, 8)
    return tb


def inner_solution_forward(x, w1, b1, w2, b2, *, tile_b=512):
    """Pallas implementation of InnerSolution.forward (== inner_model(x)).

    x : (B, D)   inner_model_inputs
    w1: (D, H), b1: (1, H), w2: (H, O), b2: (1, O)  inner-model parameters.
    """
    B, D = x.shape
    H = w1.shape[1]
    O = w2.shape[1]

    # Lane-dense padding: last dims to multiples of 128, batch to a multiple
    # of the batch tile (itself a multiple of the 8-row sublane granularity).
    Dp = _round_up(D, 128)
    Hp = _round_up(H, 128)
    Op = _round_up(O, 128)
    tb = _pick_batch_tile(B, Dp, Hp, Op, tile_b)
    Bp = _round_up(B, tb)

    f32 = jnp.float32
    x_p = jnp.zeros((Bp, Dp), f32).at[:B, :D].set(x.astype(f32))
    w1_p = jnp.zeros((Dp, Hp), f32).at[:D, :H].set(w1.astype(f32))
    b1_p = jnp.zeros((1, Hp), f32).at[:, :H].set(b1.astype(f32))
    w2_p = jnp.zeros((Hp, Op), f32).at[:H, :O].set(w2.astype(f32))
    b2_p = jnp.zeros((1, Op), f32).at[:, :O].set(b2.astype(f32))

    out_p = pl.pallas_call(
        _mlp_kernel,
        out_shape=jax.ShapeDtypeStruct((Bp, Op), f32),
        grid=(Bp // tb,),
        in_specs=[
            pl.BlockSpec((tb, Dp), lambda i: (i, 0)),   # activations: tiled batch
            pl.BlockSpec((Dp, Hp), lambda i: (0, 0)),   # W1 resident across grid
            pl.BlockSpec((1, Hp), lambda i: (0, 0)),    # b1 resident
            pl.BlockSpec((Hp, Op), lambda i: (0, 0)),   # W2 resident
            pl.BlockSpec((1, Op), lambda i: (0, 0)),    # b2 resident
        ],
        out_specs=pl.BlockSpec((tb, Op), lambda i: (i, 0)),
        compiler_params=pltpu.CompilerParams(
            dimension_semantics=("parallel",),          # shard batch across TCs
            vmem_limit_bytes=64 << 20,
        ),
    )(x_p, w1_p, b1_p, w2_p, b2_p)

    return out_p[:B, :O].astype(x.dtype)


def _reference_forward(x, w1, b1, w2, b2):
    h = jnp.maximum(x @ w1 + b1, 0.0)
    return h @ w2 + b2


if __name__ == "__main__":
    # Small shapes consistent with the module: batch=8 inner-model inputs with
    # 16 input features, hidden width 32, 8 output features.
    B, D, H, O = 8, 16, 32, 8
    key = jax.random.PRNGKey(0)
    kx, k1, k2, k3, k4 = jax.random.split(key, 5)

    x = jax.random.normal(kx, (B, D), dtype=jnp.float32)
    # Deterministic synthetic inner_model parameters (no checkpoint load).
    w1 = jax.random.normal(k1, (D, H), dtype=jnp.float32) * 0.1
    b1 = jax.random.normal(k2, (1, H), dtype=jnp.float32) * 0.01
    w2 = jax.random.normal(k3, (H, O), dtype=jnp.float32) * 0.1
    b2 = jax.random.normal(k4, (1, O), dtype=jnp.float32) * 0.01

    fwd = jax.jit(inner_solution_forward)
    out = fwd(x, w1, b1, w2, b2)
    out = jax.block_until_ready(out)

    ref = _reference_forward(x, w1, b1, w2, b2)
    assert out.shape == (B, O)
    assert jnp.allclose(out, ref, atol=1e-5, rtol=1e-5)

    print("KERNEL_OK")
</pallas_src>

<mosaic_0001>
module attributes {stable_mosaic.version = 11 : i64} {
  func.func @_mlp_kernel(%arg0: i32, %arg1: memref<8x128xf32, #tpu.memory_space<vmem>>, %arg2: memref<128x128xf32, #tpu.memory_space<vmem>>, %arg3: memref<1x128xf32, #tpu.memory_space<vmem>>, %arg4: memref<128x128xf32, #tpu.memory_space<vmem>>, %arg5: memref<1x128xf32, #tpu.memory_space<vmem>>, %arg6: memref<8x128xf32, #tpu.memory_space<vmem>>) attributes {dimension_semantics = [#tpu.dimension_semantics<parallel>], iteration_bounds = array<i64: 1>, scalar_prefetch = 0 : i64, scratch_operands = 0 : i64, tpu.core_type = #tpu.core_type<tc>, window_params = [{transform_indices = @transform_0, window_bounds = array<i64: 8, 128>}, {pipeline_mode = #tpu.pipeline_mode<synchronous>, transform_indices = @transform_1, window_bounds = array<i64: 128, 128>}, {pipeline_mode = #tpu.pipeline_mode<synchronous>, transform_indices = @transform_2, window_bounds = array<i64: 1, 128>}, {pipeline_mode = #tpu.pipeline_mode<synchronous>, transform_indices = @transform_3, window_bounds = array<i64: 128, 128>}, {pipeline_mode = #tpu.pipeline_mode<synchronous>, transform_indices = @transform_4, window_bounds = array<i64: 1, 128>}, {transform_indices = @transform_5, window_bounds = array<i64: 8, 128>}]} {
    %c0 = arith.constant 0 : index
    %c0_0 = arith.constant 0 : index
    %0 = vector.load %arg1[%c0, %c0_0] : memref<8x128xf32, #tpu.memory_space<vmem>>, vector<8x128xf32>
    %c0_1 = arith.constant 0 : index
    %c0_2 = arith.constant 0 : index
    %1 = vector.load %arg2[%c0_1, %c0_2] : memref<128x128xf32, #tpu.memory_space<vmem>>, vector<128x128xf32>
    %cst = arith.constant dense<0.000000e+00> : vector<8x128xf32>
    %2 = tpu.matmul %0, %1, %cst {dimension_numbers = #tpu.dot_dimension_numbers<[1], [0], [0], [1], [0, 0, 1, 1], [], []>} : vector<8x128xf32>, vector<128x128xf32>, vector<8x128xf32> -> vector<8x128xf32>
    %c0_3 = arith.constant 0 : index
    %c0_4 = arith.constant 0 : index
    %3 = vector.load %arg3[%c0_3, %c0_4] : memref<1x128xf32, #tpu.memory_space<vmem>>, vector<1x128xf32>
    %4 = vector.broadcast %3 : vector<1x128xf32> to vector<8x128xf32>
    %5 = arith.addf %2, %4 : vector<8x128xf32>
    %cst_5 = arith.constant 0.000000e+00 : f32
    %6 = vector.broadcast %cst_5 : f32 to vector<8x128xf32>
    %7 = arith.maximumf %5, %6 : vector<8x128xf32>
    %c0_6 = arith.constant 0 : index
    %c0_7 = arith.constant 0 : index
    %8 = vector.load %arg4[%c0_6, %c0_7] : memref<128x128xf32, #tpu.memory_space<vmem>>, vector<128x128xf32>
    %cst_8 = arith.constant dense<0.000000e+00> : vector<8x128xf32>
    %9 = tpu.matmul %7, %8, %cst_8 {dimension_numbers = #tpu.dot_dimension_numbers<[1], [0], [0], [1], [0, 0, 1, 1], [], []>} : vector<8x128xf32>, vector<128x128xf32>, vector<8x128xf32> -> vector<8x128xf32>
    %c0_9 = arith.constant 0 : index
    %c0_10 = arith.constant 0 : index
    %10 = vector.load %arg5[%c0_9, %c0_10] : memref<1x128xf32, #tpu.memory_space<vmem>>, vector<1x128xf32>
    %11 = vector.broadcast %10 : vector<1x128xf32> to vector<8x128xf32>
    %12 = arith.addf %9, %11 : vector<8x128xf32>
    %c0_11 = arith.constant 0 : index
    %c0_12 = arith.constant 0 : index
    %13 = vector.load %arg6[%c0_11, %c0_12] : memref<8x128xf32, #tpu.memory_space<vmem>>, vector<8x128xf32>
    tpu.vector_store %arg6[%c0_11, %c0_12], %12 {strides = array<i32>} : memref<8x128xf32, #tpu.memory_space<vmem>>, vector<8x128xf32>,
    return
  }
  func.func @transform_0(%arg0: i32) -> (i32, i32) {
    %c0_i32 = arith.constant 0 : i32
    %c0_i32_0 = arith.constant 0 : i32
    return %arg0, %c0_i32 : i32, i32
  }
  func.func @transform_1(%arg0: i32) -> (i32, i32) {
    %c0_i32 = arith.constant 0 : i32
    %c0_i32_0 = arith.constant 0 : i32
    %c0_i32_1 = arith.constant 0 : i32
    return %c0_i32, %c0_i32_0 : i32, i32
  }
  func.func @transform_2(%arg0: i32) -> (i32, i32) {
    %c0_i32 = arith.constant 0 : i32
    %c0_i32_0 = arith.constant 0 : i32
    %c0_i32_1 = arith.constant 0 : i32
    return %c0_i32, %c0_i32_0 : i32, i32
  }
  func.func @transform_3(%arg0: i32) -> (i32, i32) {
    %c0_i32 = arith.constant 0 : i32
    %c0_i32_0 = arith.constant 0 : i32
    %c0_i32_1 = arith.constant 0 : i32
    return %c0_i32, %c0_i32_0 : i32, i32
  }
  func.func @transform_4(%arg0: i32) -> (i32, i32) {
    %c0_i32 = arith.constant 0 : i32
    %c0_i32_0 = arith.constant 0 : i32
    %c0_i32_1 = arith.constant 0 : i32
    return %c0_i32, %c0_i32_0 : i32, i32
  }
  func.func @transform_5(%arg0: i32) -> (i32, i32) {
    %c0_i32 = arith.constant 0 : i32
    %c0_i32_0 = arith.constant 0 : i32
    return %arg0, %c0_i32 : i32, i32
  }
}

</mosaic_0001>

<llo_original>
// kernel: inner_solution_forward.1
$region0: #{inner_solution_forward.1}
  #allocation0 [shape = 'u32[]', space=smem, size = 0x4, offset = 0x4, fixed_abs, tag = 'smem constant byte address 0x4 - core index']
  #allocation1 [shape = 'u32[144,128]{1,0:T(1,128)}', space=vmem, size = 0x12000, scoped, tag = 'internal scratch']
  %s0 = inlined_call_operand.hbm [shape: f32[8,128], index: 0, kind: input, shape index: {}]
  %s1 = inlined_call_operand.hbm [shape: f32[128,128], index: 1, kind: input, shape index: {}]
  %s2 = inlined_call_operand.hbm [shape: f32[1,128], index: 2, kind: input, shape index: {}]
  %s3 = inlined_call_operand.hbm [shape: f32[128,128], index: 3, kind: input, shape index: {}]
  %s4 = inlined_call_operand.hbm [shape: f32[1,128], index: 4, kind: input, shape index: {}]
  %s5 = inlined_call_operand.hbm [shape: f32[8,128], index: 5, kind: output, shape index: {}]
  %s6 = sld [smem:[#allocation0]]
  $region50: #{inner_solution_forward.1} parent=0
    _
  %s8 = ssub.s32 1, %s6
  %s9 = scalar_select 0, %s8, %s6
  $region1: #{inner_solution_forward.1} parent=0
    #allocation2 [shape = 'u8[4096]{0}', space=vmem, size = 0x1000, scoped, tag = 'input window, operand 0, single buffered']
    #allocation3 [shape = 's32[1]{0}', space=sflag, size = 0x4, scoped, tag = 'scoped memory for inner_solution_forward.1']
    #allocation4 [shape = 's32[1]{0}', space=sflag, size = 0x4, scoped, tag = 'scoped memory for inner_solution_forward.1']
    #allocation5 [shape = 'u8[65536]{0}', space=vmem, size = 0x10000, scoped, tag = 'input window, operand 1, single buffered']
    #allocation6 [shape = 's32[1]{0}', space=sflag, size = 0x4, scoped, tag = 'scoped memory for inner_solution_forward.1']
    #allocation7 [shape = 'u8[512]{0}', space=vmem, size = 0x400, scoped, tag = 'input window, operand 2, single buffered']
    #allocation8 [shape = 'u8[65536]{0}', space=vmem, size = 0x10000, scoped, tag = 'input window, operand 3, single buffered']
    #allocation9 [shape = 's32[1]{0}', space=sflag, size = 0x4, scoped, tag = 'scoped memory for inner_solution_forward.1']
    #allocation10 [shape = 'u8[512]{0}', space=vmem, size = 0x400, scoped, tag = 'input window, operand 4, single buffered']
    #allocation11 [shape = 'u8[4096]{0}', space=vmem, size = 0x1000, scoped, tag = 'output window, operand 0, single buffered']
    %10 = vsyncpa [#allocation3], 0
    %11 = vsyncpa [#allocation6], 0
    %12 = vsyncpa [#allocation9], 0
    %13 = vsyncpa [#allocation4], 0
    // Predicated region
    $region2: #{inner_solution_forward.1} parent=1 // pred_check
      _
    $region3: #{inner_solution_forward.1} parent=1 // pred_check_branch
      %15 = sbr.rel (0) target = $region5
    $region4: #{inner_solution_forward.1} parent=1 // pred_region
      %s17 = ssub.s32 128, 128
      %18 = vsyncadd [#allocation3], %s17
      %s20 = sshll.u32 [#allocation2], 4
      %s21 = int_to_ptr.vmem [resolvable:$true] %s20
      %23 = dma.hbm_to_vmem [thread:$0]  %s0, 128, %s21, [#allocation3]
    $region5: #{inner_solution_forward.1} parent=1 // pred_fallthru
      _
    // Predicated region
    $region6: #{inner_solution_forward.1} parent=1 // pred_check
      _
    $region7: #{inner_solution_forward.1} parent=1 // pred_check_branch
      %25 = sbr.rel (0) target = $region9
    $region8: #{inner_solution_forward.1} parent=1 // pred_region
      %s27 = ssub.s32 2048, 2048
      %28 = vsyncadd [#allocation6], %s27
      %s29 = sshll.u32 [#allocation5], 4
      %s30 = int_to_ptr.vmem [resolvable:$true] %s29
      %35 = dma.hbm_to_vmem [thread:$0]  %s1, 2048, %s30, [#allocation6], 128, 128, 8
    $region9: #{inner_solution_forward.1} parent=1 // pred_fallthru
      _
    // Predicated region
    $region10: #{inner_solution_forward.1} parent=1 // pred_check
      _
    $region11: #{inner_solution_forward.1} parent=1 // pred_check_branch
      %37 = sbr.rel (0) target = $region13
    $region12: #{inner_solution_forward.1} parent=1 // pred_region
      %s39 = ssub.s32 16, 16
      %40 = vsyncadd [#allocation6], %s39
      %s42 = sshll.u32 [#allocation7], 4
      %s43 = int_to_ptr.vmem [resolvable:$true] %s42
      %45 = dma.hbm_to_vmem [thread:$0]  %s2, 16, %s43, [#allocation6]
    $region13: #{inner_solution_forward.1} parent=1 // pred_fallthru
      _
    // Predicated region
    $region14: #{inner_solution_forward.1} parent=1 // pred_check
      _
    $region15: #{inner_solution_forward.1} parent=1 // pred_check_branch
      %47 = sbr.rel (0) target = $region17
    $region16: #{inner_solution_forward.1} parent=1 // pred_region
      %s49 = ssub.s32 2048, 2048
      %50 = vsyncadd [#allocation9], %s49
      %s51 = sshll.u32 [#allocation8], 4
      %s52 = int_to_ptr.vmem [resolvable:$true] %s51
      %57 = dma.hbm_to_vmem [thread:$0]  %s3, 2048, %s52, [#allocation9], 128, 128, 8
    $region17: #{inner_solution_forward.1} parent=1 // pred_fallthru
      _
    // Predicated region
    $region18: #{inner_solution_forward.1} parent=1 // pred_check
      _
    $region19: #{inner_solution_forward.1} parent=1 // pred_check_branch
      %59 = sbr.rel (0) target = $region21
    $region20: #{inner_solution_forward.1} parent=1 // pred_region
      %s61 = ssub.s32 16, 16
      %62 = vsyncadd [#allocation9], %s61
      %s64 = sshll.u32 [#allocation10], 4
      %s65 = int_to_ptr.vmem [resolvable:$true] %s64
      %67 = dma.hbm_to_vmem [thread:$0]  %s4, 16, %s65, [#allocation9]
    $region21: #{inner_solution_forward.1} parent=1 // pred_fallthru
      _
    // Predicated region
    $region22: #{inner_solution_forward.1} parent=1 // pred_check
      _
    $region23: #{inner_solution_forward.1} parent=1 // pred_check_branch
      %69 = sbr.rel (0) target = $region25
    $region24: #{inner_solution_forward.1} parent=1 // pred_region
      %70 = dma.done [#allocation3], 128
    $region25: #{inner_solution_forward.1} parent=1 // pred_fallthru
      _
    // Predicated region
    $region26: #{inner_solution_forward.1} parent=1 // pred_check
      _
    $region27: #{inner_solution_forward.1} parent=1 // pred_check_branch
      %72 = sbr.rel (0) target = $region29
    $region28: #{inner_solution_forward.1} parent=1 // pred_region
      %73 = dma.done [#allocation6], 2048
    $region29: #{inner_solution_forward.1} parent=1 // pred_fallthru
      _
    // Predicated region
    $region30: #{inner_solution_forward.1} parent=1 // pred_check
      _
    $region31: #{inner_solution_forward.1} parent=1 // pred_check_branch
      %75 = sbr.rel (0) target = $region33
    $region32: #{inner_solution_forward.1} parent=1 // pred_region
      %76 = dma.done [#allocation6], 16
    $region33: #{inner_solution_forward.1} parent=1 // pred_fallthru
      _
    // Predicated region
    $region34: #{inner_solution_forward.1} parent=1 // pred_check
      _
    $region35: #{inner_solution_forward.1} parent=1 // pred_check_branch
      %78 = sbr.rel (0) target = $region37
    $region36: #{inner_solution_forward.1} parent=1 // pred_region
      %79 = dma.done [#allocation9], 2048
    $region37: #{inner_solution_forward.1} parent=1 // pred_fallthru
      _
    // Predicated region
    $region38: #{inner_solution_forward.1} parent=1 // pred_check
      _
    $region39: #{inner_solution_forward.1} parent=1 // pred_check_branch
      %81 = sbr.rel (0) target = $region41
    $region40: #{inner_solution_forward.1} parent=1 // pred_region
      %82 = dma.done [#allocation9], 16
    $region41: #{inner_solution_forward.1} parent=1 // pred_fallthru
      _
    %v83 = vld [vmem:[#allocation2] sm:$0xff]
    %v84 = vld [vmem:[#allocation5] sm:$0xff]
    %v85 = vld [vmem:[#allocation5 + $0x8] sm:$0xff]
    %v86 = vld [vmem:[#allocation5 + $0x10] sm:$0xff]
    %v87 = vld [vmem:[#allocation5 + $0x18] sm:$0xff]
    %v88 = vld [vmem:[#allocation5 + $0x20] sm:$0xff]
    %v89 = vld [vmem:[#allocation5 + $0x28] sm:$0xff]
    %v90 = vld [vmem:[#allocation5 + $0x30] sm:$0xff]
    %v91 = vld [vmem:[#allocation5 + $0x38] sm:$0xff]
    %v92 = vld [vmem:[#allocation5 + $0x40] sm:$0xff]
    %v93 = vld [vmem:[#allocation5 + $0x48] sm:$0xff]
    %v94 = vld [vmem:[#allocation5 + $0x50] sm:$0xff]
    %v95 = vld [vmem:[#allocation5 + $0x58] sm:$0xff]
    %v96 = vld [vmem:[#allocation5 + $0x60] sm:$0xff]
    %v97 = vld [vmem:[#allocation5 + $0x68] sm:$0xff]
    %v98 = vld [vmem:[#allocation5 + $0x70] sm:$0xff]
    %v99 = vld [vmem:[#allocation5 + $0x78] sm:$0xff]
    %v100 = vld [vmem:[#allocation7] sm:$0x1]
    %v102 = vlaneseq
    %v103 = vshrl.u32 %v102, 7
    %v104 = vsub.s32 0, %v103
    %v105 = vrot.slane %v100, %v104
    %107 = vmatprep.subr.mxu0 0.0
    %108 = vmatpush1.msra.mxu0 %v84
    %109 = vmatprep.subr.mxu0 0.0
    %110 = vmatpush1.msra.mxu0 %v85
    %111 = vmatprep.subr.mxu0 0.0
    %112 = vmatpush1.msra.mxu0 %v86
    %113 = vmatprep.subr.mxu0 0.0
    %114 = vmatpush1.msra.mxu0 %v87
    %115 = vmatprep.subr.mxu0 0.0
    %116 = vmatpush1.msra.mxu0 %v88
    %117 = vmatprep.subr.mxu0 0.0
    %118 = vmatpush1.msra.mxu0 %v89
    %119 = vmatprep.subr.mxu0 0.0
    %120 = vmatpush1.msra.mxu0 %v90
    %121 = vmatprep.subr.mxu0 0.0
    %122 = vmatpush1.msra.mxu0 %v91
    %123 = vmatprep.subr.mxu0 0.0
    %124 = vmatpush1.msra.mxu0 %v92
    %125 = vmatprep.subr.mxu0 0.0
    %126 = vmatpush1.msra.mxu0 %v93
    %127 = vmatprep.subr.mxu0 0.0
    %128 = vmatpush1.msra.mxu0 %v94
    %129 = vmatprep.subr.mxu0 0.0
    %130 = vmatpush1.msra.mxu0 %v95
    %131 = vmatprep.subr.mxu0 0.0
    %132 = vmatpush1.msra.mxu0 %v96
    %133 = vmatprep.subr.mxu0 0.0
    %134 = vmatpush1.msra.mxu0 %v97
    %135 = vmatprep.subr.mxu0 0.0
    %136 = vmatpush1.msra.mxu0 %v98
    %137 = vmatprep.subr.mxu0 0.0
    %138 = vmatpush1.msra.mxu0 %v99
    %139 = vmatprep.subr.mxu0 0.0
    %140 = vmatpush1.msra.mxu0 0.0
    %141 = vmatprep.subr.mxu0 0.0
    %142 = vmatpush1.msra.mxu0 0.0
    %143 = vmatprep.subr.mxu0 0.0
    %144 = vmatpush1.msra.mxu0 0.0
    %145 = vmatprep.subr.mxu0 0.0
    %146 = vmatpush1.msra.mxu0 0.0
    %147 = vmatprep.subr.mxu0 0.0
    %148 = vmatpush1.msra.mxu0 0.0
    %149 = vmatprep.subr.mxu0 0.0
    %150 = vmatpush1.msra.mxu0 0.0
    %151 = vmatprep.subr.mxu0 0.0
    %152 = vmatpush1.msra.mxu0 0.0
    %153 = vmatprep.subr.mxu0 0.0
    %154 = vmatpush1.msra.mxu0 0.0
    %155 = vmatprep.subr.mxu0 0.0
    %156 = vmatpush1.msra.mxu0 0.0
    %157 = vmatprep.subr.mxu0 0.0
    %158 = vmatpush1.msra.mxu0 0.0
    %159 = vmatprep.subr.mxu0 0.0
    %160 = vmatpush1.msra.mxu0 0.0
    %161 = vmatprep.subr.mxu0 0.0
    %162 = vmatpush1.msra.mxu0 0.0
    %163 = vmatprep.subr.mxu0 0.0
    %164 = vmatpush1.msra.mxu0 0.0
    %165 = vmatprep.subr.mxu0 0.0
    %166 = vmatpush1.msra.mxu0 0.0
    %167 = vmatprep.subr.mxu0 0.0
    %168 = vmatpush1.msra.mxu0 0.0
    %169 = vmatprep.subr.mxu0 0.0
    %170 = vmatpush1.msra.mxu0 0.0
    %171 = vmatprep.mubr.f32.mxu0 0.0
    %172 = vmatmul.mubr.f32.gmra.mrb[0].mxu0 %v83
    %v173 = vpop.f32.mrb[0].mxu0
    %v174 = vadd.f32 %v105, %v173
    %v175 = vpop.f32.mrb[0].mxu0
    %176 = vdwg.mxu0
    %v177 = vmax.f32 %v174, 0.0
    %v178 = vld [vmem:[#allocation8] sm:$0xff]
    %v179 = vld [vmem:[#allocation8 + $0x8] sm:$0xff]
    %v180 = vld [vmem:[#allocation8 + $0x10] sm:$0xff]
    %v181 = vld [vmem:[#allocation8 + $0x18] sm:$0xff]
    %v182 = vld [vmem:[#allocation8 + $0x20] sm:$0xff]
    %v183 = vld [vmem:[#allocation8 + $0x28] sm:$0xff]
    %v184 = vld [vmem:[#allocation8 + $0x30] sm:$0xff]
    %v185 = vld [vmem:[#allocation8 + $0x38] sm:$0xff]
    %v186 = vld [vmem:[#allocation8 + $0x40] sm:$0xff]
    %v187 = vld [vmem:[#allocation8 + $0x48] sm:$0xff]
    %v188 = vld [vmem:[#allocation8 + $0x50] sm:$0xff]
    %v189 = vld [vmem:[#allocation8 + $0x58] sm:$0xff]
    %v190 = vld [vmem:[#allocation8 + $0x60] sm:$0xff]
    %v191 = vld [vmem:[#allocation8 + $0x68] sm:$0xff]
    %v192 = vld [vmem:[#allocation8 + $0x70] sm:$0xff]
    %v193 = vld [vmem:[#allocation8 + $0x78] sm:$0xff]
    %v194 = vld [vmem:[#allocation10] sm:$0x1]
    %v196 = vlaneseq
    %v197 = vshrl.u32 %v196, 7
    %v198 = vsub.s32 0, %v197
    %v199 = vrot.slane %v194, %v198
    %201 = vmatprep.subr.mxu0 0.0
    %202 = vmatpush1.msra.mxu0 %v178
    %203 = vmatprep.subr.mxu0 0.0
    %204 = vmatpush1.msra.mxu0 %v179
    %205 = vmatprep.subr.mxu0 0.0
    %206 = vmatpush1.msra.mxu0 %v180
    %207 = vmatprep.subr.mxu0 0.0
    %208 = vmatpush1.msra.mxu0 %v181
    %209 = vmatprep.subr.mxu0 0.0
    %210 = vmatpush1.msra.mxu0 %v182
    %211 = vmatprep.subr.mxu0 0.0
    %212 = vmatpush1.msra.mxu0 %v183
    %213 = vmatprep.subr.mxu0 0.0
    %214 = vmatpush1.msra.mxu0 %v184
    %215 = vmatprep.subr.mxu0 0.0
    %216 = vmatpush1.msra.mxu0 %v185
    %217 = vmatprep.subr.mxu0 0.0
    %218 = vmatpush1.msra.mxu0 %v186
    %219 = vmatprep.subr.mxu0 0.0
    %220 = vmatpush1.msra.mxu0 %v187
    %221 = vmatprep.subr.mxu0 0.0
    %222 = vmatpush1.msra.mxu0 %v188
    %223 = vmatprep.subr.mxu0 0.0
    %224 = vmatpush1.msra.mxu0 %v189
    %225 = vmatprep.subr.mxu0 0.0
    %226 = vmatpush1.msra.mxu0 %v190
    %227 = vmatprep.subr.mxu0 0.0
    %228 = vmatpush1.msra.mxu0 %v191
    %229 = vmatprep.subr.mxu0 0.0
    %230 = vmatpush1.msra.mxu0 %v192
    %231 = vmatprep.subr.mxu0 0.0
    %232 = vmatpush1.msra.mxu0 %v193
    %233 = vmatprep.subr.mxu0 0.0
    %234 = vmatpush1.msra.mxu0 0.0
    %235 = vmatprep.subr.mxu0 0.0
    %236 = vmatpush1.msra.mxu0 0.0
    %237 = vmatprep.subr.mxu0 0.0
    %238 = vmatpush1.msra.mxu0 0.0
    %239 = vmatprep.subr.mxu0 0.0
    %240 = vmatpush1.msra.mxu0 0.0
    %241 = vmatprep.subr.mxu0 0.0
    %242 = vmatpush1.msra.mxu0 0.0
    %243 = vmatprep.subr.mxu0 0.0
    %244 = vmatpush1.msra.mxu0 0.0
    %245 = vmatprep.subr.mxu0 0.0
    %246 = vmatpush1.msra.mxu0 0.0
    %247 = vmatprep.subr.mxu0 0.0
    %248 = vmatpush1.msra.mxu0 0.0
    %249 = vmatprep.subr.mxu0 0.0
    %250 = vmatpush1.msra.mxu0 0.0
    %251 = vmatprep.subr.mxu0 0.0
    %252 = vmatpush1.msra.mxu0 0.0
    %253 = vmatprep.subr.mxu0 0.0
    %254 = vmatpush1.msra.mxu0 0.0
    %255 = vmatprep.subr.mxu0 0.0
    %256 = vmatpush1.msra.mxu0 0.0
    %257 = vmatprep.subr.mxu0 0.0
    %258 = vmatpush1.msra.mxu0 0.0
    %259 = vmatprep.subr.mxu0 0.0
    %260 = vmatpush1.msra.mxu0 0.0
    %261 = vmatprep.subr.mxu0 0.0
    %262 = vmatpush1.msra.mxu0 0.0
    %263 = vmatprep.subr.mxu0 0.0
    %264 = vmatpush1.msra.mxu0 0.0
    %265 = vmatprep.mubr.f32.mxu0 0.0
    %266 = vmatmul.mubr.f32.gmra.mrb[0].mxu0 %v177
    %v267 = vpop.f32.mrb[0].mxu0
    %v268 = vadd.f32 %v199, %v267
    %v269 = vpop.f32.mrb[0].mxu0
    %270 = vdwg.mxu0
    %271 = vst [vmem:[#allocation11] sm:$0xff] %v268
    // Predicated region
    $region42: #{inner_solution_forward.1} parent=1 // pred_check
      _
    $region43: #{inner_solution_forward.1} parent=1 // pred_check_branch
      %273 = sbr.rel (0) target = $region45
    $region44: #{inner_solution_forward.1} parent=1 // pred_region
      %s275 = ssub.s32 128, 128
      %276 = vsyncadd [#allocation4], %s275
      %s278 = sshll.u32 [#allocation11], 4
      %s279 = int_to_ptr.vmem [resolvable:$true] %s278
      %281 = dma.vmem_to_hbm [thread:$0]  %s279, 128, %s5, [#allocation4]
    $region45: #{inner_solution_forward.1} parent=1 // pred_fallthru
      _
    // Predicated region
    $region46: #{inner_solution_forward.1} parent=1 // pred_check
      _
    $region47: #{inner_solution_forward.1} parent=1 // pred_check_branch
      %283 = sbr.rel (0) target = $region49
    $region48: #{inner_solution_forward.1} parent=1 // pred_region
      %284 = dma.done [#allocation4], 128
    $region49: #{inner_solution_forward.1} parent=1 // pred_fallthru
      _
    %285 = vsyncpa [#allocation3], 1
    %286 = vsyncpa [#allocation6], 1
    %287 = vsyncpa [#allocation9], 1
    %288 = vsyncpa [#allocation4], 1

</llo_original>
